<compile_context>
chip_gen: v7x
topology: tpu7x:2x2x1
jax: 0.10.0
libtpu: 0.0.40
codegen_flags: <defaults>
</compile_context>

<pallas_src>
import math

import jax
import jax.numpy as jnp
from jax.experimental import pallas as pl
from jax.experimental.pallas import tpu as pltpu


def _round_up(x, m):
    return (x + m - 1) // m * m


# ---------------------------------------------------------------------------
# Unified "squash over contiguous lane groups" kernel (both modes use it)
# ---------------------------------------------------------------------------

def _squash_kernel(y_ref, mw_ref, m1_ref, b_ref, o_ref):
    """Segmented squash over contiguous groups of `group` lanes.

    y_ref  : (blk, L) VMEM -- rows of whole capsules (natural contiguous layout)
    mw_ref : (L, L)   VMEM -- block-diag: mw[k, j] = w[k % group] if k//group == j//group
    m1_ref : (L, L)   VMEM -- block-diag all-ones
    b_ref  : (1, 1)   SMEM -- Linear bias
    o_ref  : (blk, L) VMEM -- squashed capsules, same layout as the input

    The block-diagonal matmuls both reduce over each capsule's lanes AND
    broadcast the result back to every lane of that capsule, so the rest of the
    kernel is purely elementwise and every store is lane-dense.
    """
    y = y_ref[...].astype(jnp.float32)
    mw = mw_ref[...]
    m1 = m1_ref[...]

    # Per-capsule logits of fc(y) = y.w + b, broadcast to the capsule's lanes (MXU).
    logits = jnp.dot(y, mw, preferred_element_type=jnp.float32) + b_ref[0, 0]

    # Per-capsule sum of squares.  hi/lo split keeps the reduction f32-accurate
    # even if matmul operands are internally rounded to bf16 (m1 is exact 0/1).
    ysq = y * y
    hi = ysq.astype(jnp.bfloat16).astype(jnp.float32)
    lo = ysq - hi                                   # exact (Sterbenz: hi within 2x of ysq)
    sumsq = (jnp.dot(hi, m1, preferred_element_type=jnp.float32)
             + jnp.dot(lo, m1, preferred_element_type=jnp.float32))

    lmd = jax.nn.sigmoid(logits)                    # EUP
    norm = jnp.sqrt(sumsq)                          # EUP; exact at 0
    scale = norm / (lmd + sumsq)                    # exact divide (approx recip caused mismatch)
    o_ref[...] = (scale * y).astype(o_ref.dtype)


def _squash_lane_groups(flat, w, b, group):
    """Squash a flat array whose consecutive `group` elements form capsules."""
    n = flat.shape[0]
    assert n % group == 0, "flattened size must be divisible by the capsule dim"
    dtype = flat.dtype

    # Lane-dense layout: L = lcm(group, 128) lanes per row -> whole capsules per row.
    L = (group * 128) // math.gcd(group, 128)
    n_pad = _round_up(n, L)
    if n_pad != n:                                   # rare; zero capsules squash to zero
        flat = jnp.pad(flat, (0, n_pad - n))
    rows = n_pad // L
    rows_pad = _round_up(rows, 8)
    y2 = flat.reshape(rows, L)                       # contiguous reshape: no HBM pass
    if rows_pad != rows:                             # rare; keeps sublane blocks aligned
        y2 = jnp.pad(y2, ((0, rows_pad - rows), (0, 0)))

    # Block rows: ~512 KiB blocks, and >= ~8 grid steps whenever the data allows.
    cap = max(8, (512 * 1024) // (L * 4))
    blk = max(8, min(cap, _round_up(pl.cdiv(rows_pad, 8), 8)))
    n_steps = pl.cdiv(rows_pad, blk)                 # ragged last block is handled by Pallas

    # Block-diagonal reduce+broadcast matrices; VMEM-resident across grid steps.
    gidx = jnp.arange(L) // group
    m1 = (gidx[:, None] == gidx[None, :]).astype(jnp.float32)            # (L, L) ones blocks
    mw = m1 * jnp.tile(w.astype(jnp.float32), L // group)[:, None]       # (L, L) w blocks
    b_sm = jnp.asarray(b, jnp.float32).reshape(1, 1)

    out2 = pl.pallas_call(
        _squash_kernel,
        out_shape=jax.ShapeDtypeStruct((rows_pad, L), dtype),
        grid=(n_steps,),
        in_specs=[
            pl.BlockSpec((blk, L), lambda i: (i, 0)),
            pl.BlockSpec((L, L), lambda i: (0, 0)),       # constant map -> stays resident
            pl.BlockSpec((L, L), lambda i: (0, 0)),
            pl.BlockSpec(memory_space=pltpu.SMEM),
        ],
        out_specs=pl.BlockSpec((blk, L), lambda i: (i, 0)),
        compiler_params=pltpu.CompilerParams(
            dimension_semantics=("parallel",),
            vmem_limit_bytes=32 * 1024 * 1024,
        ),
    )(y2, mw, m1, b_sm)

    return out2.reshape(-1)[:n]


# ---------------------------------------------------------------------------
# Public API + pure-JAX reference
# ---------------------------------------------------------------------------

def primary_capsule(x, params, *, in_dim=8, mode="feature_map"):
    """JAX/Pallas equivalent of PrimaryCapsule.forward (x is NCHW)."""
    B = x.shape[0]
    if mode == "feature_map":
        w, b = params["fc_w"], params["fc_b"]
        out = _squash_lane_groups(x.reshape(-1), w, b, in_dim)   # natural layout, no transpose
        return out.reshape(B, -1, in_dim)
    elif mode == "channel":
        w, b = params["fc_channel_w"], params["fc_channel_b"]
        N = w.shape[0]
        y = x.reshape(B, -1, in_dim)                             # (B, N, D)
        assert y.shape[1] == N, "channel mode requires C*H*W/in_dim == fc_channel.in_features"
        z = jnp.transpose(y, (0, 2, 1))                          # one small wrapper-side pass
        out = _squash_lane_groups(z.reshape(-1), w, b, N)
        return out.reshape(B, in_dim, N)
    raise ValueError(f"unknown mode: {mode}")


def _reference(x, params, *, in_dim=8, mode="feature_map"):
    """Pure-JAX reference mirroring the PyTorch module (exact f32 math)."""
    B = x.shape[0]
    y = x.reshape(B, -1, in_dim)
    if mode == "channel":
        y = jnp.transpose(y, (0, 2, 1))
        w, b = params["fc_channel_w"], params["fc_channel_b"]
    else:
        w, b = params["fc_w"], params["fc_b"]
    logits = jnp.sum(y * w, axis=-1, keepdims=True) + b
    lmd = jax.nn.sigmoid(logits)
    sumsq = jnp.sum(y * y, axis=-1, keepdims=True)
    norm = jnp.sqrt(sumsq)
    scale = norm / (lmd + sumsq)
    return scale * y


if __name__ == "__main__":
    in_dim = 8
    key = jax.random.PRNGKey(0)
    kx1, kx2, kw1, kb1, kw2, kb2 = jax.random.split(key, 6)

    # feature_map mode: 4*16*16*16 / 8 = 2048 capsules.
    x_fm = jax.random.normal(kx1, (4, 16, 16, 16), jnp.float32)
    # channel mode: C*H*W/in_dim must equal 64 (fc_channel = nn.Linear(64, 1)).
    x_ch = jax.random.normal(kx2, (2, 2, 16, 16), jnp.float32)

    # Synthetic PyTorch-Linear parameters: fc: Linear(in_dim, 1); fc_channel: Linear(64, 1).
    params = {
        "fc_w": jax.random.normal(kw1, (in_dim,), jnp.float32) * 0.1,
        "fc_b": jax.random.normal(kb1, (), jnp.float32) * 0.1,
        "fc_channel_w": jax.random.normal(kw2, (64,), jnp.float32) * 0.1,
        "fc_channel_b": jax.random.normal(kb2, (), jnp.float32) * 0.1,
    }

    fwd = jax.jit(primary_capsule, static_argnames=("in_dim", "mode"))

    ok = True
    for mode, x in (("feature_map", x_fm), ("channel", x_ch)):
        out = jax.block_until_ready(fwd(x, params, in_dim=in_dim, mode=mode))
        ref = _reference(x, params, in_dim=in_dim, mode=mode)
        ok &= bool(out.shape == ref.shape)
        ok &= bool(jnp.allclose(out, ref, atol=1e-3, rtol=1e-3))

    print("KERNEL_OK" if ok else "KERNEL_MISMATCH")
</pallas_src>

<mosaic_0001>
module attributes {stable_mosaic.version = 11 : i64} {
  func.func @_squash_kernel(%arg0: i32, %arg1: memref<16x128xf32, #tpu.memory_space<vmem>>, %arg2: memref<128x128xf32, #tpu.memory_space<vmem>>, %arg3: memref<128x128xf32, #tpu.memory_space<vmem>>, %arg4: memref<1x1xf32, #tpu.memory_space<smem>>, %arg5: memref<16x128xf32, #tpu.memory_space<vmem>>) attributes {dimension_semantics = [#tpu.dimension_semantics<parallel>], iteration_bounds = array<i64: 8>, scalar_prefetch = 0 : i64, scratch_operands = 0 : i64, tpu.core_type = #tpu.core_type<tc>, window_params = [{transform_indices = @transform_0, window_bounds = array<i64: 16, 128>}, {pipeline_mode = #tpu.pipeline_mode<synchronous>, transform_indices = @transform_1, window_bounds = array<i64: 128, 128>}, {pipeline_mode = #tpu.pipeline_mode<synchronous>, transform_indices = @transform_2, window_bounds = array<i64: 128, 128>}, {transform_indices = @transform_3, window_bounds = array<i64: 1, 1>}, {transform_indices = @transform_4, window_bounds = array<i64: 16, 128>}]} {
    %c0 = arith.constant 0 : index
    %c0_0 = arith.constant 0 : index
    %0 = vector.load %arg1[%c0, %c0_0] : memref<16x128xf32, #tpu.memory_space<vmem>>, vector<16x128xf32>
    %c0_1 = arith.constant 0 : index
    %c0_2 = arith.constant 0 : index
    %1 = vector.load %arg2[%c0_1, %c0_2] : memref<128x128xf32, #tpu.memory_space<vmem>>, vector<128x128xf32>
    %c0_3 = arith.constant 0 : index
    %c0_4 = arith.constant 0 : index
    %2 = vector.load %arg3[%c0_3, %c0_4] : memref<128x128xf32, #tpu.memory_space<vmem>>, vector<128x128xf32>
    %cst = arith.constant dense<0.000000e+00> : vector<16x128xf32>
    %3 = tpu.matmul %0, %1, %cst {dimension_numbers = #tpu.dot_dimension_numbers<[1], [0], [0], [1], [0, 0, 1, 1], [], []>} : vector<16x128xf32>, vector<128x128xf32>, vector<16x128xf32> -> vector<16x128xf32>
    %c0_5 = arith.constant 0 : index
    %c0_6 = arith.constant 0 : index
    %4 = memref.load %arg4[%c0_5, %c0_6] : memref<1x1xf32, #tpu.memory_space<smem>>
    %5 = vector.broadcast %4 : f32 to vector<16x128xf32>
    %6 = arith.addf %3, %5 : vector<16x128xf32>
    %7 = arith.mulf %0, %0 : vector<16x128xf32>
    %8 = arith.truncf %7 : vector<16x128xf32> to vector<16x128xbf16>
    %9 = arith.extf %8 : vector<16x128xbf16> to vector<16x128xf32>
    %10 = arith.subf %7, %9 : vector<16x128xf32>
    %cst_7 = arith.constant dense<0.000000e+00> : vector<16x128xf32>
    %11 = tpu.matmul %9, %2, %cst_7 {dimension_numbers = #tpu.dot_dimension_numbers<[1], [0], [0], [1], [0, 0, 1, 1], [], []>} : vector<16x128xf32>, vector<128x128xf32>, vector<16x128xf32> -> vector<16x128xf32>
    %cst_8 = arith.constant dense<0.000000e+00> : vector<16x128xf32>
    %12 = tpu.matmul %10, %2, %cst_8 {dimension_numbers = #tpu.dot_dimension_numbers<[1], [0], [0], [1], [0, 0, 1, 1], [], []>} : vector<16x128xf32>, vector<128x128xf32>, vector<16x128xf32> -> vector<16x128xf32>
    %13 = arith.addf %11, %12 : vector<16x128xf32>
    %14 = arith.negf %6 : vector<16x128xf32>
    %15 = math.exp %14 : vector<16x128xf32>
    %cst_9 = arith.constant 1.000000e+00 : f32
    %16 = vector.broadcast %cst_9 : f32 to vector<16x128xf32>
    %17 = arith.addf %16, %15 : vector<16x128xf32>
    %18 = arith.divf %16, %17 : vector<16x128xf32>
    %19 = math.sqrt %13 : vector<16x128xf32>
    %20 = arith.addf %18, %13 : vector<16x128xf32>
    %21 = arith.divf %19, %20 : vector<16x128xf32>
    %22 = arith.mulf %21, %0 : vector<16x128xf32>
    %c0_10 = arith.constant 0 : index
    %c0_11 = arith.constant 0 : index
    %23 = vector.load %arg5[%c0_10, %c0_11] : memref<16x128xf32, #tpu.memory_space<vmem>>, vector<16x128xf32>
    tpu.vector_store %arg5[%c0_10, %c0_11], %22 {strides = array<i32>} : memref<16x128xf32, #tpu.memory_space<vmem>>, vector<16x128xf32>,
    return
  }
  func.func @transform_0(%arg0: i32) -> (i32, i32) {
    %c0_i32 = arith.constant 0 : i32
    %c0_i32_0 = arith.constant 0 : i32
    return %arg0, %c0_i32 : i32, i32
  }
  func.func @transform_1(%arg0: i32) -> (i32, i32) {
    %c0_i32 = arith.constant 0 : i32
    %c0_i32_0 = arith.constant 0 : i32
    %c0_i32_1 = arith.constant 0 : i32
    return %c0_i32, %c0_i32_0 : i32, i32
  }
  func.func @transform_2(%arg0: i32) -> (i32, i32) {
    %c0_i32 = arith.constant 0 : i32
    %c0_i32_0 = arith.constant 0 : i32
    %c0_i32_1 = arith.constant 0 : i32
    return %c0_i32, %c0_i32_0 : i32, i32
  }
  func.func @transform_3(%arg0: i32) -> (i32, i32) {
    %c0_i32 = arith.constant 0 : i32
    %c0_i32_0 = arith.constant 0 : i32
    %c0_i32_1 = arith.constant 0 : i32
    return %c0_i32, %c0_i32_0 : i32, i32
  }
  func.func @transform_4(%arg0: i32) -> (i32, i32) {
    %c0_i32 = arith.constant 0 : i32
    %c0_i32_0 = arith.constant 0 : i32
    return %arg0, %c0_i32 : i32, i32
  }
}

</mosaic_0001>

<llo_original>
// kernel: tile.8
$region0: #{tile.8}
  #allocation0 [shape = 's32[1]{0}', space=sflag, size = 0x4, scoped, tag = 'scoped memory for tile.8']
  %s0 = inlined_call_operand.vmem [shape: f32[8], index: 0, kind: input, shape index: {}]
  %s1 = inlined_call_operand.vmem [shape: f32[16,8], index: 1, kind: output, shape index: {}]
  // Predicated region
  $region2: #{tile.8} parent=0 // pred_check
    _
  $region3: #{tile.8} parent=0 // pred_check_branch
    %3 = sbr.rel (0) target = $region5
  $region4: #{tile.8} parent=0 // pred_region
    _
  $region5: #{tile.8} parent=0 // pred_fallthru
    _
  %v4 = vld [vmem:[%s0] ss:$0 sm:$0xff]
  %5 = vst [vmem:[%s1] sm:$0xff] %v4
  %s6 = scalar_lea.vmem %s1, 8
  %7 = vst [vmem:[%s6] sm:$0xff] %v4

// kernel: mul.5
$region0: #{mul.5}
  %s0 = inlined_call_operand.vmem [shape: f32[16,8], index: 0, kind: input, shape index: {}]
  %s1 = inlined_call_operand.vmem [shape: f32[128], index: 1, kind: output, shape index: {}]
  $region1: #{mul.5} parent=0
    #allocation0 [shape = 'u8[4096]{0}', space=vmem, size = 0x1000, scoped, tag = 'scoped mem for output reshape']
    %v2 = vld [vmem:[%s0] sm:$0x1]
    %vm3 = vcmask 64512
    %4 = vst.msk [vmem:[#allocation0] sm:$0x1] %vm3, %v2
    %s5 = scalar_lea.vmem %s0, 15
    %v6 = vld [vmem:[%s5] sm:$0x1]
    %7 = vrot.lane.b32.xlu0 %v6, 120
    %v8 = vpop.permute.xlu0 %7
    %vm9 = vcmask 1048512
    %10 = vst.msk [vmem:[#allocation0] sm:$0x1] %vm9, %v8
    %s11 = scalar_lea.vmem %s0, 14
    %v12 = vld [vmem:[%s11] sm:$0x1]
    %13 = vrot.lane.b32.xlu0 %v12, 112
    %v14 = vpop.permute.xlu0 %13
    %vm15 = vcmask 982912
    %16 = vst.msk [vmem:[#allocation0] sm:$0x1] %vm15, %v14
    %s17 = scalar_lea.vmem %s0, 13
    %v18 = vld [vmem:[%s17] sm:$0x1]
    %19 = vrot.lane.b32.xlu0 %v18, 104
    %v20 = vpop.permute.xlu0 %19
    %vm21 = vcmask 917312
    %22 = vst.msk [vmem:[#allocation0] sm:$0x1] %vm21, %v20
    %s23 = scalar_lea.vmem %s0, 12
    %v24 = vld [vmem:[%s23] sm:$0x1]
    %25 = vrot.lane.b32.xlu0 %v24, 96
    %v26 = vpop.permute.xlu0 %25
    %vm27 = vcmask 851712
    %28 = vst.msk [vmem:[#allocation0] sm:$0x1] %vm27, %v26
    %s29 = scalar_lea.vmem %s0, 11
    %v30 = vld [vmem:[%s29] sm:$0x1]
    %31 = vrot.lane.b32.xlu0 %v30, 88
    %v32 = vpop.permute.xlu0 %31
    %vm33 = vcmask 786112
    %34 = vst.msk [vmem:[#allocation0] sm:$0x1] %vm33, %v32
    %s35 = scalar_lea.vmem %s0, 10
    %v36 = vld [vmem:[%s35] sm:$0x1]
    %37 = vrot.lane.b32.xlu0 %v36, 80
    %v38 = vpop.permute.xlu0 %37
    %vm39 = vcmask 720512
    %40 = vst.msk [vmem:[#allocation0] sm:$0x1] %vm39, %v38
    %s41 = scalar_lea.vmem %s0, 9
    %v42 = vld [vmem:[%s41] sm:$0x1]
    %43 = vrot.lane.b32.xlu0 %v42, 72
    %v44 = vpop.permute.xlu0 %43
    %vm45 = vcmask 654912
    %46 = vst.msk [vmem:[#allocation0] sm:$0x1] %vm45, %v44
    %s47 = scalar_lea.vmem %s0, 8
    %v48 = vld [vmem:[%s47] sm:$0x1]
    %49 = vrot.lane.b32.xlu0 %v48, 64
    %v50 = vpop.permute.xlu0 %49
    %vm51 = vcmask 589312
    %52 = vst.msk [vmem:[#allocation0] sm:$0x1] %vm51, %v50
    %s53 = scalar_lea.vmem %s0, 7
    %v54 = vld [vmem:[%s53] sm:$0x1]
    %55 = vrot.lane.b32.xlu0 %v54, 56
    %v56 = vpop.permute.xlu0 %55
    %vm57 = vcmask 523712
    %58 = vst.msk [vmem:[#allocation0] sm:$0x1] %vm57, %v56
    %s59 = scalar_lea.vmem %s0, 6
    %v60 = vld [vmem:[%s59] sm:$0x1]
    %61 = vrot.lane.b32.xlu0 %v60, 48
    %v62 = vpop.permute.xlu0 %61
    %vm63 = vcmask 458112
    %64 = vst.msk [vmem:[#allocation0] sm:$0x1] %vm63, %v62
    %s65 = scalar_lea.vmem %s0, 5
    %v66 = vld [vmem:[%s65] sm:$0x1]
    %67 = vrot.lane.b32.xlu0 %v66, 40
    %v68 = vpop.permute.xlu0 %67
    %vm69 = vcmask 392512
    %70 = vst.msk [vmem:[#allocation0] sm:$0x1] %vm69, %v68
    %s71 = scalar_lea.vmem %s0, 4
    %v72 = vld [vmem:[%s71] sm:$0x1]
    %73 = vrot.lane.b32.xlu0 %v72, 32
    %v74 = vpop.permute.xlu0 %73
    %vm75 = vcmask 326912
    %76 = vst.msk [vmem:[#allocation0] sm:$0x1] %vm75, %v74
    %s77 = scalar_lea.vmem %s0, 3
    %v78 = vld [vmem:[%s77] sm:$0x1]
    %79 = vrot.lane.b32.xlu0 %v78, 24
    %v80 = vpop.permute.xlu0 %79
    %vm81 = vcmask 261312
    %82 = vst.msk [vmem:[#allocation0] sm:$0x1] %vm81, %v80
    %s83 = scalar_lea.vmem %s0, 2
    %v84 = vld [vmem:[%s83] sm:$0x1]
    %85 = vrot.lane.b32.xlu0 %v84, 16
    %v86 = vpop.permute.xlu0 %85
    %vm87 = vcmask 195712
    %88 = vst.msk [vmem:[#allocation0] sm:$0x1] %vm87, %v86
    %s89 = scalar_lea.vmem %s0, 1
    %v90 = vld [vmem:[%s89] sm:$0x1]
    %91 = vrot.lane.b32.xlu0 %v90, 8
    %v92 = vpop.permute.xlu0 %91
    %vm93 = vcmask 130112
    %94 = vst.msk [vmem:[#allocation0] sm:$0x1] %vm93, %v92
    %s96 = sshllo.u32 0, 1
    %v98 = vld [vmem:[#allocation0] sm:%s96]
    %s99 = sshllo.u32 0, 1
    %100 = vst [vmem:[%s1] sm:%s99] %v98

// kernel: primary_capsule.1
$region0: #{primary_capsule.1}
  #allocation0 [shape = 'u32[]', space=smem, size = 0x4, offset = 0x4, fixed_abs, tag = 'smem constant byte address 0x4 - core index']
  #allocation1 [shape = 'u32[144,128]{1,0:T(1,128)}', space=vmem, size = 0x12000, scoped, tag = 'internal scratch']
  #allocation2 [shape = 'f32[1,1]{1,0:T(1,128)S(6)}', space=smem, size = 0x200, scoped, tag = 'scoped memory for primary_capsule.1']
  %s0 = inlined_call_operand.vmem [shape: f32[128,128], index: 0, kind: input, shape index: {}]
  %s1 = inlined_call_operand.vmem [shape: f32[128,128], index: 1, kind: input, shape index: {}]
  %s2 = inlined_call_operand.vmem [shape: f32[128,128], index: 2, kind: input, shape index: {}]
  %s3 = inlined_call_operand.<no memory space> [shape: f32[1,1], index: 3, kind: input, shape index: {}]
  %s4 = inlined_call_operand.vmem [shape: f32[128,128], index: 4, kind: output, shape index: {}]
  %s5 = sld [smem:[#allocation0]]
  $region49: #{primary_capsule.1} parent=0
    _
  %s7 = ssub.s32 1, %s5
  %s8 = scalar_select 0, %s7, %s5
  %9 = sst [smem:[#allocation2]] %s3
  loop: start=0, step=1, limit=10
  $region2: #{primary_capsule.1} parent=0 // loop_pre_header
    _
  $region3: #{primary_capsule.1} parent=0 // loop_header
    %s11 = sphi 0, %s15
    %p12 = scmp.ge.s32.totalorder %s11, 10
    %s21 = sphi 0, %s23
    %s24 = sphi 0, %s21
    %s25 = sphi 0, %s24
    %s41 = sphi 0, %s25
    %s45 = sphi 0, %s45
    %s47 = sphi 0, %s45
    %s48 = sphi 0, %s47
    %s62 = sphi 0, %s48
    %s66 = sphi 0, %s66
    %s68 = sphi 0, %s66
    %s69 = sphi 0, %s68
    %s83 = sphi 0, %s69
    %s87 = sphi 0, %s87
    %s89 = sphi 0, %s87
    %s90 = sphi 0, %s89
    %s104 = sphi 0, %s90
    %s110 = sphi 0, %s112
    %s113 = sphi 0, %s110
    %s114 = sphi 0, %s113
    %s130 = sphi 0, %s114
  $region4: #{primary_capsule.1} parent=0 // loop_header_branch
    %14 = sbr.rel (%p12) target = $region8
  $region5: #{primary_capsule.1} parent=0 // loop_body
    %s16 = ssub.s32 %s11, 1
    %s17 = ssub.s32 %s11, 2
    %s18 = sadd.s32 %s11, 1
    %s19 = ssub.s32 %s11, %s18
    %p20 = scmp.eq.s32.totalorder %s19, 0
    %s22 = sadd.s32 %s21, 1
    %s23 = scalar_select %p20, %s21, %s22
    %p26 = pneg %p20
    %p27 = scmp.eq.s32.totalorder %s11, 7
    %p28 = por %p26, %p27
    %p29 = scmp.ne.s32.totalorder %s21, %s24
    %p30 = scmp.eq.s32.totalorder %s11, 0
    %p31 = por %p29, %p30
    %p32 = scmp.ne.s32.totalorder %s21, %s24
    %p33 = scmp.eq.s32.totalorder %s16, 7
    %p34 = por %p32, %p33
    %p35 = scmp.ne.s32.totalorder %s24, %s25
    %p36 = scmp.eq.s32.totalorder %s16, 0
    %p37 = por %p35, %p36
    %p38 = scmp.ne.s32.totalorder %s24, %s25
    %p39 = scmp.eq.s32.totalorder %s17, 7
    %p40 = por %p38, %p39
    %p42 = scmp.ne.s32.totalorder %s25, %s41
    %p43 = scmp.eq.s32.totalorder %s17, 0
    %p44 = por %p42, %p43
    %s46 = sadd.s32 %s45, 1
    %p49 = scmp.eq.s32.totalorder %s11, 7
    %p50 = scmp.ne.s32.totalorder %s45, %s47
    %p51 = scmp.eq.s32.totalorder %s11, 0
    %p52 = por %p50, %p51
    %p53 = scmp.ne.s32.totalorder %s45, %s47
    %p54 = scmp.eq.s32.totalorder %s16, 7
    %p55 = por %p53, %p54
    %p56 = scmp.ne.s32.totalorder %s47, %s48
    %p57 = scmp.eq.s32.totalorder %s16, 0
    %p58 = por %p56, %p57
    %p59 = scmp.ne.s32.totalorder %s47, %s48
    %p60 = scmp.eq.s32.totalorder %s17, 7
    %p61 = por %p59, %p60
    %p63 = scmp.ne.s32.totalorder %s48, %s62
    %p64 = scmp.eq.s32.totalorder %s17, 0
    %p65 = por %p63, %p64
    %s67 = sadd.s32 %s66, 1
    %p70 = scmp.eq.s32.totalorder %s11, 7
    %p71 = scmp.ne.s32.totalorder %s66, %s68
    %p72 = scmp.eq.s32.totalorder %s11, 0
    %p73 = por %p71, %p72
    %p74 = scmp.ne.s32.totalorder %s66, %s68
    %p75 = scmp.eq.s32.totalorder %s16, 7
    %p76 = por %p74, %p75
    %p77 = scmp.ne.s32.totalorder %s68, %s69
    %p78 = scmp.eq.s32.totalorder %s16, 0
    %p79 = por %p77, %p78
    %p80 = scmp.ne.s32.totalorder %s68, %s69
    %p81 = scmp.eq.s32.totalorder %s17, 7
    %p82 = por %p80, %p81
    %p84 = scmp.ne.s32.totalorder %s69, %s83
    %p85 = scmp.eq.s32.totalorder %s17, 0
    %p86 = por %p84, %p85
    %s88 = sadd.s32 %s87, 1
    %p91 = scmp.eq.s32.totalorder %s11, 7
    %p92 = scmp.ne.s32.totalorder %s87, %s89
    %p93 = scmp.eq.s32.totalorder %s11, 0
    %p94 = por %p92, %p93
    %p95 = scmp.ne.s32.totalorder %s87, %s89
    %p96 = scmp.eq.s32.totalorder %s16, 7
    %p97 = por %p95, %p96
    %p98 = scmp.ne.s32.totalorder %s89, %s90
    %p99 = scmp.eq.s32.totalorder %s16, 0
    %p100 = por %p98, %p99
    %p101 = scmp.ne.s32.totalorder %s89, %s90
    %p102 = scmp.eq.s32.totalorder %s17, 7
    %p103 = por %p101, %p102
    %p105 = scmp.ne.s32.totalorder %s90, %s104
    %p106 = scmp.eq.s32.totalorder %s17, 0
    %p107 = por %p105, %p106
    %s108 = ssub.s32 %s11, %s18
    %p109 = scmp.eq.s32.totalorder %s108, 0
    %s111 = sadd.s32 %s110, 1
    %s112 = scalar_select %p109, %s110, %s111
    %p115 = pneg %p109
    %p116 = scmp.eq.s32.totalorder %s11, 7
    %p117 = por %p115, %p116
    %p118 = scmp.ne.s32.totalorder %s110, %s113
    %p119 = scmp.eq.s32.totalorder %s11, 0
    %p120 = por %p118, %p119
    %p121 = scmp.ne.s32.totalorder %s110, %s113
    %p122 = scmp.eq.s32.totalorder %s16, 7
    %p123 = por %p121, %p122
    %p124 = scmp.ne.s32.totalorder %s113, %s114
    %p125 = scmp.eq.s32.totalorder %s16, 0
    %p126 = por %p124, %p125
    %p127 = scmp.ne.s32.totalorder %s113, %s114
    %p128 = scmp.eq.s32.totalorder %s17, 7
    %p129 = por %p127, %p128
    %p131 = scmp.ne.s32.totalorder %s114, %s130
    %p132 = scmp.eq.s32.totalorder %s17, 0
    %p133 = por %p131, %p132
    %p134 = scmp.le.s32.totalorder 1, %s11
    %p135 = scmp.lt.s32.totalorder %s11, 9
    %p136 = pnand %p134, %p135
    %p137 = pneg %p136
    // Predicated region
    $region9: #{primary_capsule.1} parent=5 // pred_check
      _
    $region10: #{primary_capsule.1} parent=5 // pred_check_branch
      %139 = sbr.rel (%p136) target = $region12
    $region11: #{primary_capsule.1} parent=5 // pred_region
      %s140 = ssub.s32 %s11, 1
      // Predicated region
      $region13: #{primary_capsule.1} parent=11 // pred_check
        %p141 = pneg %p58
      $region14: #{primary_capsule.1} parent=11 // pred_check_branch
        %143 = sbr.rel (%p141) target = $region16
      $region15: #{primary_capsule.1} parent=11 // pred_region
        _
      $region16: #{primary_capsule.1} parent=11 // pred_fallthru
        _
      // Predicated region
      $region17: #{primary_capsule.1} parent=11 // pred_check
        %p144 = pneg %p79
      $region18: #{primary_capsule.1} parent=11 // pred_check_branch
        %146 = sbr.rel (%p144) target = $region20
      $region19: #{primary_capsule.1} parent=11 // pred_region
        _
      $region20: #{primary_capsule.1} parent=11 // pred_fallthru
        _
      // Predicated region
      $region21: #{primary_capsule.1} parent=11 // pred_check
        %p147 = pneg %p100
      $region22: #{primary_capsule.1} parent=11 // pred_check_branch
        %149 = sbr.rel (%p147) target = $region24
      $region23: #{primary_capsule.1} parent=11 // pred_region
        _
      $region24: #{primary_capsule.1} parent=11 // pred_fallthru
        _
    $region12: #{primary_capsule.1} parent=5 // pred_fallthru
      _
    %p150 = scmp.lt.s32.totalorder %s11, 8
    // Predicated region
    $region25: #{primary_capsule.1} parent=5 // pred_check
      %p151 = pneg %p150
    $region26: #{primary_capsule.1} parent=5 // pred_check_branch
      %153 = sbr.rel (%p151) target = $region28
    $region27: #{primary_capsule.1} parent=5 // pred_region
      // Predicated region
      $region29: #{primary_capsule.1} parent=27 // pred_check
        %p154 = pneg %p31
      $region30: #{primary_capsule.1} parent=27 // pred_check_branch
        %156 = sbr.rel (%p154) target = $region32
      $region31: #{primary_capsule.1} parent=27 // pred_region
        %s157 = smul.u32 2, %s11
        %p158 = scmp.lt.s32.totalorder %s157, 15
        %s159 = scalar_select %p158, %s157, 15
        %s160 = smul.addr %s159, 8
        %s161 = scalar_lea.vmem %s0, %s160
        %s162 = smul.u32 2, %s11
      $region32: #{primary_capsule.1} parent=27 // pred_fallthru
        _
    $region28: #{primary_capsule.1} parent=5 // pred_fallthru
      _
    %p163 = scmp.le.s32.totalorder 1, %s11
    %p164 = scmp.lt.s32.totalorder %s11, 9
    %p165 = pnand %p163, %p164
    %p166 = pneg %p165
    // Predicated region
    $region33: #{primary_capsule.1} parent=5 // pred_check
      _
    $region34: #{primary_capsule.1} parent=5 // pred_check_branch
      %168 = sbr.rel (%p165) target = $region36
    $region35: #{primary_capsule.1} parent=5 // pred_region
      %s169 = ssub.s32 %s11, 1
      %s170 = smul.u32 2, %s16
      %p171 = scmp.lt.s32.totalorder %s170, 15
      %s172 = scalar_select %p171, %s170, 15
      %s173 = smul.addr %s172, 8
      %s174 = scalar_lea.vmem %s0, %s173
      %p175 = pneg %p37
      %p176 = pneg %p34
      %p177 = pneg %p58
      %p178 = pneg %p55
      %p179 = pneg %p79
      %p180 = pneg %p76
      %p181 = pneg %p100
      %p182 = pneg %p97
      %p183 = pneg %p126
      %p184 = pneg %p123
      %s185 = smul.u32 2, %s16
      %p186 = scmp.lt.s32.totalorder %s185, 15
      %s187 = scalar_select %p186, %s185, 15
      %s188 = smul.addr %s187, 8
      %s189 = scalar_lea.vmem %s4, %s188
      %s190 = smul.u32 2, %s16
      %p191 = scmp.lt.s32.totalorder %s190, 15
      %s192 = scalar_select %p191, %s190, 15
      %s193 = smul.addr %s192, 8
      %s194 = scalar_lea.vmem %s0, %s193
      %s195 = smul.u32 2, %s16
      %s196 = smul.u32 2, %s16
      %p197 = scmp.lt.s32.totalorder %s196, 15
      %s198 = scalar_select %p197, %s196, 15
      %s199 = smul.addr %s198, 8
      %s200 = scalar_lea.vmem %s4, %s199
      %s201 = smul.u32 2, %s16
      %v202 = vld [vmem:[%s194] sm:$0xff]
      %v203 = vld [vmem:[%s194 + $0x8] sm:$0xff]
      %v204 = vld [vmem:[%s1] sm:$0xff]
      %v205 = vld [vmem:[%s1 + $0x8] sm:$0xff]
      %v206 = vld [vmem:[%s1 + $0x10] sm:$0xff]
      %v207 = vld [vmem:[%s1 + $0x18] sm:$0xff]
      %v208 = vld [vmem:[%s1 + $0x20] sm:$0xff]
      %v209 = vld [vmem:[%s1 + $0x28] sm:$0xff]
      %v210 = vld [vmem:[%s1 + $0x30] sm:$0xff]
      %v211 = vld [vmem:[%s1 + $0x38] sm:$0xff]
      %v212 = vld [vmem:[%s1 + $0x40] sm:$0xff]
      %v213 = vld [vmem:[%s1 + $0x48] sm:$0xff]
      %v214 = vld [vmem:[%s1 + $0x50] sm:$0xff]
      %v215 = vld [vmem:[%s1 + $0x58] sm:$0xff]
      %v216 = vld [vmem:[%s1 + $0x60] sm:$0xff]
      %v217 = vld [vmem:[%s1 + $0x68] sm:$0xff]
      %v218 = vld [vmem:[%s1 + $0x70] sm:$0xff]
      %v219 = vld [vmem:[%s1 + $0x78] sm:$0xff]
      %v220 = vld [vmem:[%s2] sm:$0xff]
      %v221 = vld [vmem:[%s2 + $0x8] sm:$0xff]
      %v222 = vld [vmem:[%s2 + $0x10] sm:$0xff]
      %v223 = vld [vmem:[%s2 + $0x18] sm:$0xff]
      %v224 = vld [vmem:[%s2 + $0x20] sm:$0xff]
      %v225 = vld [vmem:[%s2 + $0x28] sm:$0xff]
      %v226 = vld [vmem:[%s2 + $0x30] sm:$0xff]
      %v227 = vld [vmem:[%s2 + $0x38] sm:$0xff]
      %v228 = vld [vmem:[%s2 + $0x40] sm:$0xff]
      %v229 = vld [vmem:[%s2 + $0x48] sm:$0xff]
      %v230 = vld [vmem:[%s2 + $0x50] sm:$0xff]
      %v231 = vld [vmem:[%s2 + $0x58] sm:$0xff]
      %v232 = vld [vmem:[%s2 + $0x60] sm:$0xff]
      %v233 = vld [vmem:[%s2 + $0x68] sm:$0xff]
      %v234 = vld [vmem:[%s2 + $0x70] sm:$0xff]
      %v235 = vld [vmem:[%s2 + $0x78] sm:$0xff]
      %s236 = sld [smem:[#allocation2]]
      %v237 = vstv %s236
      %238 = vmatprep.subr.mxu0 0.0
      %239 = vmatpush1.msra.mxu0 %v204
      %240 = vmatprep.subr.mxu0 0.0
      %241 = vmatpush1.msra.mxu0 %v205
      %242 = vmatprep.subr.mxu0 0.0
      %243 = vmatpush1.msra.mxu0 %v206
      %244 = vmatprep.subr.mxu0 0.0
      %245 = vmatpush1.msra.mxu0 %v207
      %246 = vmatprep.subr.mxu0 0.0
      %247 = vmatpush1.msra.mxu0 %v208
      %248 = vmatprep.subr.mxu0 0.0
      %249 = vmatpush1.msra.mxu0 %v209
      %250 = vmatprep.subr.mxu0 0.0
      %251 = vmatpush1.msra.mxu0 %v210
      %252 = vmatprep.subr.mxu0 0.0
      %253 = vmatpush1.msra.mxu0 %v211
      %254 = vmatprep.subr.mxu0 0.0
      %255 = vmatpush1.msra.mxu0 %v212
      %256 = vmatprep.subr.mxu0 0.0
      %257 = vmatpush1.msra.mxu0 %v213
      %258 = vmatprep.subr.mxu0 0.0
      %259 = vmatpush1.msra.mxu0 %v214
      %260 = vmatprep.subr.mxu0 0.0
      %261 = vmatpush1.msra.mxu0 %v215
      %262 = vmatprep.subr.mxu0 0.0
      %263 = vmatpush1.msra.mxu0 %v216
      %264 = vmatprep.subr.mxu0 0.0
      %265 = vmatpush1.msra.mxu0 %v217
      %266 = vmatprep.subr.mxu0 0.0
      %267 = vmatpush1.msra.mxu0 %v218
      %268 = vmatprep.subr.mxu0 0.0
      %269 = vmatpush1.msra.mxu0 %v219
      %270 = vmatprep.subr.mxu0 0.0
      %271 = vmatpush1.msra.mxu0 0.0
      %272 = vmatprep.subr.mxu0 0.0
      %273 = vmatpush1.msra.mxu0 0.0
      %274 = vmatprep.subr.mxu0 0.0
      %275 = vmatpush1.msra.mxu0 0.0
      %276 = vmatprep.subr.mxu0 0.0
      %277 = vmatpush1.msra.mxu0 0.0
      %278 = vmatprep.subr.mxu0 0.0
      %279 = vmatpush1.msra.mxu0 0.0
      %280 = vmatprep.subr.mxu0 0.0
      %281 = vmatpush1.msra.mxu0 0.0
      %282 = vmatprep.subr.mxu0 0.0
      %283 = vmatpush1.msra.mxu0 0.0
      %284 = vmatprep.subr.mxu0 0.0
      %285 = vmatpush1.msra.mxu0 0.0
      %286 = vmatprep.subr.mxu0 0.0
      %287 = vmatpush1.msra.mxu0 0.0
      %288 = vmatprep.subr.mxu0 0.0
      %289 = vmatpush1.msra.mxu0 0.0
      %290 = vmatprep.subr.mxu0 0.0
      %291 = vmatpush1.msra.mxu0 0.0
      %292 = vmatprep.subr.mxu0 0.0
      %293 = vmatpush1.msra.mxu0 0.0
      %294 = vmatprep.subr.mxu0 0.0
      %295 = vmatpush1.msra.mxu0 0.0
      %296 = vmatprep.subr.mxu0 0.0
      %297 = vmatpush1.msra.mxu0 0.0
      %298 = vmatprep.subr.mxu0 0.0
      %299 = vmatpush1.msra.mxu0 0.0
      %300 = vmatprep.subr.mxu0 0.0
      %301 = vmatpush1.msra.mxu0 0.0
      %302 = vmatprep.mubr.f32.mxu0 0.0
      %303 = vmatmul.mubr.f32.gmra.mrb[0].mxu0 %v202
      %v304 = vpop.f32.mrb[0].mxu0
      %v305 = vadd.f32 %v237, %v304
      %v306 = vpop.f32.mrb[0].mxu0
      %307 = vmatprep.mubr.f32.mxu0 0.0
      %308 = vmatmul.mubr.f32.gmra.mrb[0].mxu0 %v203
      %v309 = vpop.f32.mrb[0].mxu0
      %v310 = vadd.f32 %v237, %v309
      %v311 = vpop.f32.mrb[0].mxu0
      %312 = vdwg.mxu0
      %v313 = vmul.f32 %v202, %v202
      %v314 = vmul.f32 %v203, %v203
      %v315 = vpack.c.bf16 %v314, %v313
      %v316 = vunpack.c.l.bf16 %v315
      %v317 = vunpack.c.h.bf16 %v315
      %v318 = vsub.f32 %v313, %v316
      %v319 = vsub.f32 %v314, %v317
      %320 = vmatprep.subr.mxu0 0.0
      %321 = vmatpush1.msra.mxu0 %v220
      %322 = vmatprep.subr.mxu0 0.0
      %323 = vmatpush1.msra.mxu0 %v221
      %324 = vmatprep.subr.mxu0 0.0
      %325 = vmatpush1.msra.mxu0 %v222
      %326 = vmatprep.subr.mxu0 0.0
      %327 = vmatpush1.msra.mxu0 %v223
      %328 = vmatprep.subr.mxu0 0.0
      %329 = vmatpush1.msra.mxu0 %v224
      %330 = vmatprep.subr.mxu0 0.0
      %331 = vmatpush1.msra.mxu0 %v225
      %332 = vmatprep.subr.mxu0 0.0
      %333 = vmatpush1.msra.mxu0 %v226
      %334 = vmatprep.subr.mxu0 0.0
      %335 = vmatpush1.msra.mxu0 %v227
      %336 = vmatprep.subr.mxu0 0.0
      %337 = vmatpush1.msra.mxu0 %v228
      %338 = vmatprep.subr.mxu0 0.0
      %339 = vmatpush1.msra.mxu0 %v229
      %340 = vmatprep.subr.mxu0 0.0
      %341 = vmatpush1.msra.mxu0 %v230
      %342 = vmatprep.subr.mxu0 0.0
      %343 = vmatpush1.msra.mxu0 %v231
      %344 = vmatprep.subr.mxu0 0.0
      %345 = vmatpush1.msra.mxu0 %v232
      %346 = vmatprep.subr.mxu0 0.0
      %347 = vmatpush1.msra.mxu0 %v233
      %348 = vmatprep.subr.mxu0 0.0
      %349 = vmatpush1.msra.mxu0 %v234
      %350 = vmatprep.subr.mxu0 0.0
      %351 = vmatpush1.msra.mxu0 %v235
      %352 = vmatprep.subr.mxu0 0.0
      %353 = vmatpush1.msra.mxu0 0.0
      %354 = vmatprep.subr.mxu0 0.0
      %355 = vmatpush1.msra.mxu0 0.0
      %356 = vmatprep.subr.mxu0 0.0
      %357 = vmatpush1.msra.mxu0 0.0
      %358 = vmatprep.subr.mxu0 0.0
      %359 = vmatpush1.msra.mxu0 0.0
      %360 = vmatprep.subr.mxu0 0.0
      %361 = vmatpush1.msra.mxu0 0.0
      %362 = vmatprep.subr.mxu0 0.0
      %363 = vmatpush1.msra.mxu0 0.0
      %364 = vmatprep.subr.mxu0 0.0
      %365 = vmatpush1.msra.mxu0 0.0
      %366 = vmatprep.subr.mxu0 0.0
      %367 = vmatpush1.msra.mxu0 0.0
      %368 = vmatprep.subr.mxu0 0.0
      %369 = vmatpush1.msra.mxu0 0.0
      %370 = vmatprep.subr.mxu0 0.0
      %371 = vmatpush1.msra.mxu0 0.0
      %372 = vmatprep.subr.mxu0 0.0
      %373 = vmatpush1.msra.mxu0 0.0
      %374 = vmatprep.subr.mxu0 0.0
      %375 = vmatpush1.msra.mxu0 0.0
      %376 = vmatprep.subr.mxu0 0.0
      %377 = vmatpush1.msra.mxu0 0.0
      %378 = vmatprep.subr.mxu0 0.0
      %379 = vmatpush1.msra.mxu0 0.0
      %380 = vmatprep.subr.mxu0 0.0
      %381 = vmatpush1.msra.mxu0 0.0
      %382 = vmatprep.subr.mxu0 0.0
      %383 = vmatpush1.msra.mxu0 0.0
      %384 = vmatprep.mubr.f32.mxu0 0.0
      %385 = vmatmul.mubr.f32.gmra.mrb[0].mxu0 %v318
      %v386 = vpop.f32.mrb[0].mxu0
      %v387 = vadd.f32 0.0, %v386
      %v388 = vpop.f32.mrb[0].mxu0
      %389 = vmatprep.mubr.f32.mxu0 0.0
      %390 = vmatmul.mubr.f32.gmra.mrb[0].mxu0 %v319
      %v391 = vpop.f32.mrb[0].mxu0
      %v392 = vadd.f32 0.0, %v391
      %v393 = vpop.f32.mrb[0].mxu0
      %394 = vdwg.mxu0
      %395 = vmatprep.subr.mxu0 0.0
      %396 = vmatpush1.msra.mxu0 %v220
      %397 = vmatprep.subr.mxu0 0.0
      %398 = vmatpush1.msra.mxu0 %v221
      %399 = vmatprep.subr.mxu0 0.0
      %400 = vmatpush1.msra.mxu0 %v222
      %401 = vmatprep.subr.mxu0 0.0
      %402 = vmatpush1.msra.mxu0 %v223
      %403 = vmatprep.subr.mxu0 0.0
      %404 = vmatpush1.msra.mxu0 %v224
      %405 = vmatprep.subr.mxu0 0.0
      %406 = vmatpush1.msra.mxu0 %v225
      %407 = vmatprep.subr.mxu0 0.0
      %408 = vmatpush1.msra.mxu0 %v226
      %409 = vmatprep.subr.mxu0 0.0
      %410 = vmatpush1.msra.mxu0 %v227
      %411 = vmatprep.subr.mxu0 0.0
      %412 = vmatpush1.msra.mxu0 %v228
      %413 = vmatprep.subr.mxu0 0.0
      %414 = vmatpush1.msra.mxu0 %v229
      %415 = vmatprep.subr.mxu0 0.0
      %416 = vmatpush1.msra.mxu0 %v230
      %417 = vmatprep.subr.mxu0 0.0
      %418 = vmatpush1.msra.mxu0 %v231
      %419 = vmatprep.subr.mxu0 0.0
      %420 = vmatpush1.msra.mxu0 %v232
      %421 = vmatprep.subr.mxu0 0.0
      %422 = vmatpush1.msra.mxu0 %v233
      %423 = vmatprep.subr.mxu0 0.0
      %424 = vmatpush1.msra.mxu0 %v234
      %425 = vmatprep.subr.mxu0 0.0
      %426 = vmatpush1.msra.mxu0 %v235
      %427 = vmatprep.subr.mxu0 0.0
      %428 = vmatpush1.msra.mxu0 0.0
      %429 = vmatprep.subr.mxu0 0.0
      %430 = vmatpush1.msra.mxu0 0.0
      %431 = vmatprep.subr.mxu0 0.0
      %432 = vmatpush1.msra.mxu0 0.0
      %433 = vmatprep.subr.mxu0 0.0
      %434 = vmatpush1.msra.mxu0 0.0
      %435 = vmatprep.subr.mxu0 0.0
      %436 = vmatpush1.msra.mxu0 0.0
      %437 = vmatprep.subr.mxu0 0.0
      %438 = vmatpush1.msra.mxu0 0.0
      %439 = vmatprep.subr.mxu0 0.0
      %440 = vmatpush1.msra.mxu0 0.0
      %441 = vmatprep.subr.mxu0 0.0
      %442 = vmatpush1.msra.mxu0 0.0
      %443 = vmatprep.subr.mxu0 0.0
      %444 = vmatpush1.msra.mxu0 0.0
      %445 = vmatprep.subr.mxu0 0.0
      %446 = vmatpush1.msra.mxu0 0.0
      %447 = vmatprep.subr.mxu0 0.0
      %448 = vmatpush1.msra.mxu0 0.0
      %449 = vmatprep.subr.mxu0 0.0
      %450 = vmatpush1.msra.mxu0 0.0
      %451 = vmatprep.subr.mxu0 0.0
      %452 = vmatpush1.msra.mxu0 0.0
      %453 = vmatprep.subr.mxu0 0.0
      %454 = vmatpush1.msra.mxu0 0.0
      %455 = vmatprep.subr.mxu0 0.0
      %456 = vmatpush1.msra.mxu0 0.0
      %457 = vmatprep.subr.mxu0 0.0
      %458 = vmatpush1.msra.mxu0 0.0
      %459 = vmatprep.mubr.f32.mxu0 0.0
      %460 = vmatmul.mubr.f32.gmra.mrb[0].mxu0 %v316
      %v461 = vpop.f32.mrb[0].mxu0
      %v462 = vadd.f32 %v387, %v461
      %v463 = vpop.f32.mrb[0].mxu0
      %464 = vmatprep.mubr.f32.mxu0 0.0
      %465 = vmatmul.mubr.f32.gmra.mrb[0].mxu0 %v317
      %v466 = vpop.f32.mrb[0].mxu0
      %v467 = vadd.f32 %v392, %v466
      %v468 = vpop.f32.mrb[0].mxu0
      %469 = vdwg.mxu0
      %v470 = vxor.u32 %v305, 2147483648
      %v471 = vxor.u32 %v310, 2147483648
      %v472 = vmul.f32 %v470, 1.442695
      %v473 = vpow.pop %v472
      %v474 = vmul.f32 %v471, 1.442695
      %v475 = vpow.pop %v474
      %v476 = vadd.f32 %v473, 1.0
      %v477 = vadd.f32 %v475, 1.0
      %v478 = vrcp.pop %v476
      %v479 = vmul.f32 1.0, %v478
      %v480 = vrcp.pop %v477
      %v481 = vmul.f32 1.0, %v480
      %v482 = vrsqrt.pop %v462
      %v483 = vmul.f32 %v462, %v482
      %vm484 = vcmp.eq.f32.partialorder %v462, inf
      %v485 = vsel %vm484, %v462, %v483
      %vm486 = vcmp.eq.f32.partialorder %v462, 0.0
      %v487 = vand.u32 %v462, 2147483648
      %v488 = vsel %vm486, %v487, %v485
      %v489 = vrsqrt.pop %v467
      %v490 = vmul.f32 %v467, %v489
      %vm491 = vcmp.eq.f32.partialorder %v467, inf
      %v492 = vsel %vm491, %v467, %v490
      %vm493 = vcmp.eq.f32.partialorder %v467, 0.0
      %v494 = vand.u32 %v467, 2147483648
      %v495 = vsel %vm493, %v494, %v492
      %v496 = vadd.f32 %v479, %v462
      %v497 = vadd.f32 %v481, %v467
      %v498 = vrcp.pop %v496
      %v499 = vmul.f32 %v488, %v498
      %v500 = vrcp.pop %v497
      %v501 = vmul.f32 %v495, %v500
      %v502 = vmul.f32 %v499, %v202
      %v503 = vmul.f32 %v501, %v203
      %504 = vst [vmem:[%s200] sm:$0xff] %v502
      %505 = vst [vmem:[%s200 + $0x8] sm:$0xff] %v503
      %s506 = smul.u32 2, %s16
      %p507 = scmp.lt.s32.totalorder %s506, 15
      %s508 = scalar_select %p507, %s506, 15
      %s509 = smul.addr %s508, 8
      %s510 = scalar_lea.vmem %s4, %s509
      // Predicated region
      $region37: #{primary_capsule.1} parent=35 // pred_check
        %p511 = pneg %p123
      $region38: #{primary_capsule.1} parent=35 // pred_check_branch
        %513 = sbr.rel (%p511) target = $region40
      $region39: #{primary_capsule.1} parent=35 // pred_region
        %s514 = smul.u32 2, %s16
      $region40: #{primary_capsule.1} parent=35 // pred_fallthru
        _
    $region36: #{primary_capsule.1} parent=5 // pred_fallthru
      _
    %p515 = scmp.le.s32.totalorder 2, %s11
    // Predicated region
    $region41: #{primary_capsule.1} parent=5 // pred_check
      %p516 = pneg %p515
    $region42: #{primary_capsule.1} parent=5 // pred_check_branch
      %518 = sbr.rel (%p516) target = $region44
    $region43: #{primary_capsule.1} parent=5 // pred_region
      %s519 = ssub.s32 %s11, 2
      // Predicated region
      $region45: #{primary_capsule.1} parent=43 // pred_check
        %p520 = pneg %p129
      $region46: #{primary_capsule.1} parent=43 // pred_check_branch
        %522 = sbr.rel (%p520) target = $region48
      $region47: #{primary_capsule.1} parent=43 // pred_region
        %s523 = smul.u32 2, %s17
        %p524 = scmp.lt.s32.totalorder %s523, 15
        %s525 = scalar_select %p524, %s523, 15
        %s526 = smul.addr %s525, 8
        %s527 = scalar_lea.vmem %s4, %s526
      $region48: #{primary_capsule.1} parent=43 // pred_fallthru
        _
    $region44: #{primary_capsule.1} parent=5 // pred_fallthru
      _
  $region6: #{primary_capsule.1} parent=0 // loop_footer
    %s15 = sadd.s32 1, %s11
  $region7: #{primary_capsule.1} parent=0 // loop_footer_branch
    %10 = sbr.rel target = $region3
  $region8: #{primary_capsule.1} parent=0 // loop_exit
    _

</llo_original>
